<compile_context>
chip_gen: v5e
topology: v5e:2x2
jax: 0.10.0
libtpu: 0.0.40
codegen_flags: <defaults>
</compile_context>

<pallas_src>
import functools

import jax
import jax.numpy as jnp
from jax import lax
from jax.experimental import pallas as pl
from jax.experimental.pallas import tpu as pltpu

SMOOTH = 0.1
EPS = 1e-7
_OUT_LANES = 128
_TARGET_STEP_BYTES = 2 * 1024 * 1024     # ~2 MiB of HBM traffic per grid step
_VMEM_INPUT_BUDGET = 20 * 1024 * 1024    # padded, double-buffered input blocks
_VMEM_LIMIT_BYTES = 32 * 1024 * 1024     # safe on v5e (128 MiB), v6e (128), v7x (64)


def _round_up(x, m):
    return (x + m - 1) // m * m


def _round_down(x, m):
    return max(m, (x // m) * m)


def _dice_partial_kernel(logits_ref, labels_ref,
                         inter_out, psum_out, tsum_out,
                         inter_acc, psum_acc, tsum_acc,
                         *, hw, tile, tiles_per_chunk, ragged):
    """Grid = (P pixel-chunks, N images, pixel tiles per chunk).

    Axes 0/1 are "parallel" (megacore can split on either), axis 2 is the
    pixel reduction.  Emits per-(chunk, image) partial per-class sums."""
    p = pl.program_id(0)
    i = pl.program_id(2)

    @pl.when(i == 0)
    def _init():
        inter_acc[...] = jnp.zeros_like(inter_acc)
        psum_acc[...] = jnp.zeros_like(psum_acc)
        tsum_acc[...] = jnp.zeros_like(tsum_acc)

    logits = logits_ref[...].astype(jnp.float32)               # (C, TP)
    C, TP = logits.shape

    # softmax over the class (sublane) axis == log_softmax(dim=1).exp()
    m = jnp.max(logits, axis=0, keepdims=True)                 # (1, TP)
    e = jnp.exp(logits - m)                                    # (C, TP)
    inv = pl.reciprocal(jnp.sum(e, axis=0, keepdims=True))     # exact: 1 recip/px
    probs = e * inv                                            # (C, TP)

    labels = labels_ref[...].astype(jnp.int32)                 # (1, TP)
    class_ids = lax.broadcasted_iota(jnp.int32, (C, 1), 0)     # (C, 1)
    onehot_b = labels == class_ids                             # (C, TP) broadcast

    if ragged:
        # Compiled only when the chunked tiling does not cover HW exactly.
        pos = (p * tiles_per_chunk + i) * tile + lax.broadcasted_iota(
            jnp.int32, (1, TP), 1)
        valid = pos < hw                                       # (1, TP)
        probs = jnp.where(valid, probs, 0.0)                   # NaN-safe select
        onehot_b = jnp.logical_and(onehot_b, valid)

    onehot = onehot_b.astype(jnp.float32)

    # per-class partial reductions over this pixel tile
    inter_acc[...] += jnp.sum(probs * onehot, axis=1, keepdims=True)   # (C, 1)
    psum_acc[...] += jnp.sum(probs, axis=1, keepdims=True)             # (C, 1)
    tsum_acc[...] += jnp.sum(onehot, axis=1, keepdims=True)            # (C, 1)

    @pl.when(i == pl.num_programs(2) - 1)
    def _flush():
        lanes = inter_out.shape[-1]
        inter_out[...] = jnp.broadcast_to(inter_acc[...], (C, lanes))
        psum_out[...] = jnp.broadcast_to(psum_acc[...], (C, lanes))
        tsum_out[...] = jnp.broadcast_to(tsum_acc[...], (C, lanes))


def _pick_tile(hw, hbm_bytes_per_px, vmem_bytes_per_px):
    hw_padded = _round_up(hw, 128)
    cap = min(hw_padded,
              _round_down(_TARGET_STEP_BYTES // hbm_bytes_per_px, 128),
              _round_down(_VMEM_INPUT_BUDGET // vmem_bytes_per_px, 128))
    cap = max(128, cap)
    # Prefer a tile that divides HW exactly (ragged-mask branch never emitted),
    # but never shrink below cap/4: amortizing the ~0.35 us per-step overhead
    # matters more than saving two VPU ops/element.
    t = cap
    floor = max(128, cap // 4)
    while t >= floor:
        if hw % t == 0:
            return t
        t -= 128
    return cap


def dice_loss(y_pred, y_true):
    """y_pred: (N, C, H, W) float logits, y_true: (N, H, W) integer labels."""
    N, C, H, W = y_pred.shape
    HW = H * W

    # Stream logits in their natural layout: no transpose, no eager upcast.
    logits = y_pred.reshape(N, C, HW)
    # Labels are pure HBM traffic on a memory-bound kernel: ship as int8 when
    # the class count fits (upcast inside the kernel before the compare).
    label_dtype = jnp.int8 if C <= 127 else jnp.int32
    labels = y_true.reshape(N, 1, HW).astype(label_dtype)

    logit_bytes = jnp.dtype(logits.dtype).itemsize
    label_bytes = jnp.dtype(label_dtype).itemsize
    hbm_px = C * logit_bytes + label_bytes
    # VMEM per pixel of the double-buffered input blocks, including sublane
    # padding: logits pad C to the dtype's sublane tile, the single label row
    # pads to a full 32-byte sublane granule.
    sub = 8 * 4 // logit_bytes
    vmem_px = 2 * (_round_up(C, sub) * logit_bytes + 32)

    tile = _pick_tile(HW, hbm_px, vmem_px)
    num_tiles = pl.cdiv(HW, tile)

    # Extra "parallel" pixel-chunk axis: gives v7x's second TensorCore work
    # even when N == 1; degenerates to a single chunk for tiny inputs.
    P = 2 if num_tiles >= 2 else 1
    tpc = pl.cdiv(num_tiles, P)                   # pixel tiles per chunk
    ragged = (P * tpc * tile) != HW
    last_block = num_tiles - 1

    kernel = functools.partial(_dice_partial_kernel, hw=HW, tile=tile,
                               tiles_per_chunk=tpc, ragged=ragged)

    def in_map(p, n, i):
        # Clamp so the (possibly) empty trailing tile of the last chunk still
        # maps to a valid block; its pixels are fully masked in-kernel.
        return (n, 0, jnp.minimum(p * tpc + i, last_block))

    part_shape = jax.ShapeDtypeStruct((P, N, C, _OUT_LANES), jnp.float32)
    out_spec = pl.BlockSpec((None, None, C, _OUT_LANES),
                            lambda p, n, i: (p, n, 0, 0))

    cost = pl.CostEstimate(
        flops=int(10 * N * HW * C),
        transcendentals=int(N * HW * C),
        bytes_accessed=int(N * HW * hbm_px + 3 * P * N * C * _OUT_LANES * 4),
    )

    inter_p, psum_p, tsum_p = pl.pallas_call(
        kernel,
        out_shape=(part_shape, part_shape, part_shape),
        grid_spec=pltpu.PrefetchScalarGridSpec(
            num_scalar_prefetch=0,
            grid=(P, N, tpc),
            in_specs=[
                pl.BlockSpec((None, C, tile), in_map),
                pl.BlockSpec((None, 1, tile), in_map),
            ],
            out_specs=(out_spec, out_spec, out_spec),
            scratch_shapes=[
                pltpu.VMEM((C, 1), jnp.float32),   # intersection accumulator
                pltpu.VMEM((C, 1), jnp.float32),   # sum(probs) accumulator
                pltpu.VMEM((C, 1), jnp.float32),   # target-sum accumulator
            ],
        ),
        compiler_params=pltpu.CompilerParams(
            dimension_semantics=("parallel", "parallel", "arbitrary"),
            vmem_limit_bytes=_VMEM_LIMIT_BYTES),
        cost_estimate=cost,
    )(logits, labels)

    # Tiny per-class finalize in plain JAX (sum chunk/image partials, lane 0).
    inter = jnp.sum(inter_p[..., 0], axis=(0, 1))              # (C,)
    psum = jnp.sum(psum_p[..., 0], axis=(0, 1))                # (C,)
    tsum = jnp.sum(tsum_p[..., 0], axis=(0, 1))                # (C,)
    card = psum + tsum
    dice = (2.0 * inter + SMOOTH) / jnp.maximum(card + SMOOTH, EPS)
    loss = (1.0 - dice) * (tsum > 0).astype(jnp.float32)       # zero absent classes
    return jnp.mean(loss)                                      # loss.mean() over C


def dice_loss_reference(y_pred, y_true):
    """Pure-JAX reference matching the PyTorch DiceLoss defaults."""
    N, C, H, W = y_pred.shape
    probs = jax.nn.softmax(y_pred.astype(jnp.float32), axis=1).reshape(N, C, -1)
    onehot = jax.nn.one_hot(y_true.reshape(N, -1), C, dtype=jnp.float32)
    onehot = jnp.transpose(onehot, (0, 2, 1))                  # (N, C, HW)
    dims = (0, 2)
    inter = jnp.sum(probs * onehot, axis=dims)
    card = jnp.sum(probs + onehot, axis=dims)
    dice = (2.0 * inter + SMOOTH) / jnp.maximum(card + SMOOTH, EPS)
    loss = (1.0 - dice) * (jnp.sum(onehot, axis=dims) > 0).astype(jnp.float32)
    return jnp.mean(loss)


if __name__ == "__main__":
    key = jax.random.PRNGKey(0)
    k_pred, k_true = jax.random.split(key)
    N, C, H, W = 2, 4, 16, 16
    y_pred = jax.random.normal(k_pred, (N, C, H, W), dtype=jnp.float32)
    y_true = jax.random.randint(k_true, (N, H, W), 0, C, dtype=jnp.int32)

    out = jax.block_until_ready(dice_loss(y_pred, y_true))
    ref = jax.block_until_ready(dice_loss_reference(y_pred, y_true))
    assert jnp.allclose(out, ref, atol=1e-5), (out, ref)
    print("KERNEL_OK")
</pallas_src>

<mosaic_0001>
module attributes {stable_mosaic.version = 11 : i64} {
  func.func @_dice_partial_kernel(%arg0: i32, %arg1: i32, %arg2: i32, %arg3: memref<1x4x256xf32, #tpu.memory_space<vmem>>, %arg4: memref<1x1x256xi8, #tpu.memory_space<vmem>>, %arg5: memref<1x1x4x128xf32, #tpu.memory_space<vmem>>, %arg6: memref<1x1x4x128xf32, #tpu.memory_space<vmem>>, %arg7: memref<1x1x4x128xf32, #tpu.memory_space<vmem>>, %arg8: memref<4x1xf32, #tpu.memory_space<vmem>>, %arg9: memref<4x1xf32, #tpu.memory_space<vmem>>, %arg10: memref<4x1xf32, #tpu.memory_space<vmem>>) attributes {dimension_semantics = [#tpu.dimension_semantics<parallel>, #tpu.dimension_semantics<parallel>, #tpu.dimension_semantics<arbitrary>], iteration_bounds = array<i64: 1, 2, 1>, scalar_prefetch = 0 : i64, scratch_operands = 3 : i64, tpu.core_type = #tpu.core_type<tc>, window_params = [{transform_indices = @transform_0, window_bounds = array<i64: 1, 4, 256>}, {transform_indices = @transform_1, window_bounds = array<i64: 1, 1, 256>}, {transform_indices = @transform_2, window_bounds = array<i64: 1, 1, 4, 128>}, {transform_indices = @transform_3, window_bounds = array<i64: 1, 1, 4, 128>}, {transform_indices = @transform_4, window_bounds = array<i64: 1, 1, 4, 128>}]} {
    %c0_i32 = arith.constant 0 : i32
    %0 = arith.cmpi eq, %arg2, %c0_i32 : i32
    %1 = arith.extui %0 : i1 to i32
    %c0_i32_0 = arith.constant 0 : i32
    %2 = arith.cmpi ne, %1, %c0_i32_0 : i32
    scf.if %2 {
      %cst_24 = arith.constant 0.000000e+00 : f32
      %43 = vector.broadcast %cst_24 : f32 to vector<4x1xf32>
      %c0_25 = arith.constant 0 : index
      %c0_26 = arith.constant 0 : index
      %44 = vector.load %arg8[%c0_25, %c0_26] : memref<4x1xf32, #tpu.memory_space<vmem>>, vector<4x1xf32>
      tpu.vector_store %arg8[%c0_25, %c0_26], %43 {strides = array<i32>} : memref<4x1xf32, #tpu.memory_space<vmem>>, vector<4x1xf32>,
      %cst_27 = arith.constant 0.000000e+00 : f32
      %45 = vector.broadcast %cst_27 : f32 to vector<4x1xf32>
      %c0_28 = arith.constant 0 : index
      %c0_29 = arith.constant 0 : index
      %46 = vector.load %arg9[%c0_28, %c0_29] : memref<4x1xf32, #tpu.memory_space<vmem>>, vector<4x1xf32>
      tpu.vector_store %arg9[%c0_28, %c0_29], %45 {strides = array<i32>} : memref<4x1xf32, #tpu.memory_space<vmem>>, vector<4x1xf32>,
      %cst_30 = arith.constant 0.000000e+00 : f32
      %47 = vector.broadcast %cst_30 : f32 to vector<4x1xf32>
      %c0_31 = arith.constant 0 : index
      %c0_32 = arith.constant 0 : index
      %48 = vector.load %arg10[%c0_31, %c0_32] : memref<4x1xf32, #tpu.memory_space<vmem>>, vector<4x1xf32>
      tpu.vector_store %arg10[%c0_31, %c0_32], %47 {strides = array<i32>} : memref<4x1xf32, #tpu.memory_space<vmem>>, vector<4x1xf32>,
    } else {
    }
    %c0 = arith.constant 0 : index
    %c0_1 = arith.constant 0 : index
    %c0_2 = arith.constant 0 : index
    %3 = vector.load %arg3[%c0, %c0_1, %c0_2] : memref<1x4x256xf32, #tpu.memory_space<vmem>>, vector<1x4x256xf32>
    %4 = vector.shape_cast %3 : vector<1x4x256xf32> to vector<4x256xf32>
    %cst = arith.constant dense<0xFF800000> : vector<256xf32>
    %5 = vector.multi_reduction <maximumf>, %4, %cst [0] : vector<4x256xf32> to vector<256xf32>
    %6 = vector.shape_cast %5 : vector<256xf32> to vector<1x256xf32>
    %7 = vector.broadcast %6 : vector<1x256xf32> to vector<4x256xf32>
    %8 = arith.subf %4, %7 : vector<4x256xf32>
    %9 = math.exp %8 : vector<4x256xf32>
    %cst_3 = arith.constant dense<0.000000e+00> : vector<256xf32>
    %10 = vector.multi_reduction <add>, %9, %cst_3 [0] : vector<4x256xf32> to vector<256xf32>
    %11 = vector.shape_cast %10 : vector<256xf32> to vector<1x256xf32>
    %12 = tpu.reciprocal %11 : vector<1x256xf32> -> vector<1x256xf32>
    %13 = vector.broadcast %12 : vector<1x256xf32> to vector<4x256xf32>
    %14 = arith.mulf %9, %13 : vector<4x256xf32>
    %c0_4 = arith.constant 0 : index
    %c0_5 = arith.constant 0 : index
    %c0_6 = arith.constant 0 : index
    %15 = vector.load %arg4[%c0_4, %c0_5, %c0_6] : memref<1x1x256xi8, #tpu.memory_space<vmem>>, vector<1x1x256xi8>
    %16 = vector.shape_cast %15 : vector<1x1x256xi8> to vector<1x256xi8>
    %17 = arith.extsi %16 : vector<1x256xi8> to vector<1x256xi32>
    %18 = tpu.iota {dimensions = array<i32: 0>} : vector<4x1xi32>
    %19 = vector.broadcast %17 : vector<1x256xi32> to vector<4x256xi32>
    %20 = vector.broadcast %18 : vector<4x1xi32> to vector<4x256xi32>
    %21 = arith.cmpi eq, %19, %20 : vector<4x256xi32>
    %22 = arith.extui %21 : vector<4x256xi1> to vector<4x256xi32>
    %23 = arith.sitofp %22 : vector<4x256xi32> to vector<4x256xf32>
    %c0_7 = arith.constant 0 : index
    %c0_8 = arith.constant 0 : index
    %24 = vector.load %arg8[%c0_7, %c0_8] : memref<4x1xf32, #tpu.memory_space<vmem>>, vector<4x1xf32>
    %25 = arith.mulf %14, %23 : vector<4x256xf32>
    %cst_9 = arith.constant dense<0.000000e+00> : vector<4xf32>
    %26 = vector.multi_reduction <add>, %25, %cst_9 [1] : vector<4x256xf32> to vector<4xf32>
    %27 = vector.shape_cast %26 : vector<4xf32> to vector<4x1xf32>
    %28 = arith.addf %24, %27 : vector<4x1xf32>
    %c0_10 = arith.constant 0 : index
    %c0_11 = arith.constant 0 : index
    %29 = vector.load %arg8[%c0_10, %c0_11] : memref<4x1xf32, #tpu.memory_space<vmem>>, vector<4x1xf32>
    tpu.vector_store %arg8[%c0_10, %c0_11], %28 {strides = array<i32>} : memref<4x1xf32, #tpu.memory_space<vmem>>, vector<4x1xf32>,
    %c0_12 = arith.constant 0 : index
    %c0_13 = arith.constant 0 : index
    %30 = vector.load %arg9[%c0_12, %c0_13] : memref<4x1xf32, #tpu.memory_space<vmem>>, vector<4x1xf32>
    %cst_14 = arith.constant dense<0.000000e+00> : vector<4xf32>
    %31 = vector.multi_reduction <add>, %14, %cst_14 [1] : vector<4x256xf32> to vector<4xf32>
    %32 = vector.shape_cast %31 : vector<4xf32> to vector<4x1xf32>
    %33 = arith.addf %30, %32 : vector<4x1xf32>
    %c0_15 = arith.constant 0 : index
    %c0_16 = arith.constant 0 : index
    %34 = vector.load %arg9[%c0_15, %c0_16] : memref<4x1xf32, #tpu.memory_space<vmem>>, vector<4x1xf32>
    tpu.vector_store %arg9[%c0_15, %c0_16], %33 {strides = array<i32>} : memref<4x1xf32, #tpu.memory_space<vmem>>, vector<4x1xf32>,
    %c0_17 = arith.constant 0 : index
    %c0_18 = arith.constant 0 : index
    %35 = vector.load %arg10[%c0_17, %c0_18] : memref<4x1xf32, #tpu.memory_space<vmem>>, vector<4x1xf32>
    %cst_19 = arith.constant dense<0.000000e+00> : vector<4xf32>
    %36 = vector.multi_reduction <add>, %23, %cst_19 [1] : vector<4x256xf32> to vector<4xf32>
    %37 = vector.shape_cast %36 : vector<4xf32> to vector<4x1xf32>
    %38 = arith.addf %35, %37 : vector<4x1xf32>
    %c0_20 = arith.constant 0 : index
    %c0_21 = arith.constant 0 : index
    %39 = vector.load %arg10[%c0_20, %c0_21] : memref<4x1xf32, #tpu.memory_space<vmem>>, vector<4x1xf32>
    tpu.vector_store %arg10[%c0_20, %c0_21], %38 {strides = array<i32>} : memref<4x1xf32, #tpu.memory_space<vmem>>, vector<4x1xf32>,
    %c0_i32_22 = arith.constant 0 : i32
    %40 = arith.cmpi eq, %arg2, %c0_i32_22 : i32
    %41 = arith.extui %40 : i1 to i32
    %c0_i32_23 = arith.constant 0 : i32
    %42 = arith.cmpi ne, %41, %c0_i32_23 : i32
    scf.if %42 {
      %c0_24 = arith.constant 0 : index
      %c0_25 = arith.constant 0 : index
      %43 = vector.load %arg8[%c0_24, %c0_25] : memref<4x1xf32, #tpu.memory_space<vmem>>, vector<4x1xf32>
      %44 = vector.shape_cast %43 : vector<4x1xf32> to vector<4x1xf32>
      %45 = vector.broadcast %44 : vector<4x1xf32> to vector<4x128xf32>
      %c0_26 = arith.constant 0 : index
      %c0_27 = arith.constant 0 : index
      %c0_28 = arith.constant 0 : index
      %c0_29 = arith.constant 0 : index
      %46 = vector.load %arg5[%c0_26, %c0_27, %c0_28, %c0_29] : memref<1x1x4x128xf32, #tpu.memory_space<vmem>>, vector<1x1x4x128xf32>
      %47 = vector.shape_cast %46 : vector<1x1x4x128xf32> to vector<4x128xf32>
      %48 = vector.shape_cast %45 : vector<4x128xf32> to vector<1x1x4x128xf32>
      tpu.vector_store %arg5[%c0_26, %c0_27, %c0_28, %c0_29], %48 {strides = array<i32>} : memref<1x1x4x128xf32, #tpu.memory_space<vmem>>, vector<1x1x4x128xf32>,
      %c0_30 = arith.constant 0 : index
      %c0_31 = arith.constant 0 : index
      %49 = vector.load %arg9[%c0_30, %c0_31] : memref<4x1xf32, #tpu.memory_space<vmem>>, vector<4x1xf32>
      %50 = vector.shape_cast %49 : vector<4x1xf32> to vector<4x1xf32>
      %51 = vector.broadcast %50 : vector<4x1xf32> to vector<4x128xf32>
      %c0_32 = arith.constant 0 : index
      %c0_33 = arith.constant 0 : index
      %c0_34 = arith.constant 0 : index
      %c0_35 = arith.constant 0 : index
      %52 = vector.load %arg6[%c0_32, %c0_33, %c0_34, %c0_35] : memref<1x1x4x128xf32, #tpu.memory_space<vmem>>, vector<1x1x4x128xf32>
      %53 = vector.shape_cast %52 : vector<1x1x4x128xf32> to vector<4x128xf32>
      %54 = vector.shape_cast %51 : vector<4x128xf32> to vector<1x1x4x128xf32>
      tpu.vector_store %arg6[%c0_32, %c0_33, %c0_34, %c0_35], %54 {strides = array<i32>} : memref<1x1x4x128xf32, #tpu.memory_space<vmem>>, vector<1x1x4x128xf32>,
      %c0_36 = arith.constant 0 : index
      %c0_37 = arith.constant 0 : index
      %55 = vector.load %arg10[%c0_36, %c0_37] : memref<4x1xf32, #tpu.memory_space<vmem>>, vector<4x1xf32>
      %56 = vector.shape_cast %55 : vector<4x1xf32> to vector<4x1xf32>
      %57 = vector.broadcast %56 : vector<4x1xf32> to vector<4x128xf32>
      %c0_38 = arith.constant 0 : index
      %c0_39 = arith.constant 0 : index
      %c0_40 = arith.constant 0 : index
      %c0_41 = arith.constant 0 : index
      %58 = vector.load %arg7[%c0_38, %c0_39, %c0_40, %c0_41] : memref<1x1x4x128xf32, #tpu.memory_space<vmem>>, vector<1x1x4x128xf32>
      %59 = vector.shape_cast %58 : vector<1x1x4x128xf32> to vector<4x128xf32>
      %60 = vector.shape_cast %57 : vector<4x128xf32> to vector<1x1x4x128xf32>
      tpu.vector_store %arg7[%c0_38, %c0_39, %c0_40, %c0_41], %60 {strides = array<i32>} : memref<1x1x4x128xf32, #tpu.memory_space<vmem>>, vector<1x1x4x128xf32>,
    } else {
    }
    return
  }
  func.func @transform_0(%arg0: i32, %arg1: i32, %arg2: i32) -> (i32, i32, i32) {
    %c1_i32 = arith.constant 1 : i32
    %0 = arith.muli %arg0, %c1_i32 : i32
    %1 = arith.addi %0, %arg2 : i32
    %c0_i32 = arith.constant 0 : i32
    %2 = arith.minsi %1, %c0_i32 : i32
    %c0_i32_0 = arith.constant 0 : i32
    %c0_i32_1 = arith.constant 0 : i32
    return %arg1, %c0_i32_0, %2 : i32, i32, i32
  }
  func.func @transform_1(%arg0: i32, %arg1: i32, %arg2: i32) -> (i32, i32, i32) {
    %c1_i32 = arith.constant 1 : i32
    %0 = arith.muli %arg0, %c1_i32 : i32
    %1 = arith.addi %0, %arg2 : i32
    %c0_i32 = arith.constant 0 : i32
    %2 = arith.minsi %1, %c0_i32 : i32
    %c0_i32_0 = arith.constant 0 : i32
    %c0_i32_1 = arith.constant 0 : i32
    return %arg1, %c0_i32_0, %2 : i32, i32, i32
  }
  func.func @transform_2(%arg0: i32, %arg1: i32, %arg2: i32) -> (i32, i32, i32, i32) {
    %c0_i32 = arith.constant 0 : i32
    %c0_i32_0 = arith.constant 0 : i32
    %c0_i32_1 = arith.constant 0 : i32
    return %arg0, %arg1, %c0_i32, %c0_i32_0 : i32, i32, i32, i32
  }
  func.func @transform_3(%arg0: i32, %arg1: i32, %arg2: i32) -> (i32, i32, i32, i32) {
    %c0_i32 = arith.constant 0 : i32
    %c0_i32_0 = arith.constant 0 : i32
    %c0_i32_1 = arith.constant 0 : i32
    return %arg0, %arg1, %c0_i32, %c0_i32_0 : i32, i32, i32, i32
  }
  func.func @transform_4(%arg0: i32, %arg1: i32, %arg2: i32) -> (i32, i32, i32, i32) {
    %c0_i32 = arith.constant 0 : i32
    %c0_i32_0 = arith.constant 0 : i32
    %c0_i32_1 = arith.constant 0 : i32
    return %arg0, %arg1, %c0_i32, %c0_i32_0 : i32, i32, i32, i32
  }
}

</mosaic_0001>

<llo_original>
// kernel: tpu_custom_call.1
$region0: #{tpu_custom_call.1}
  #allocation0 [shape = 'u32[]', space=smem, size = 0x4, offset = 0x4, fixed_abs, tag = 'smem constant byte address 0x4 - core index']
  #allocation1 [shape = 'u32[72,128]{1,0:T(1,128)}', space=vmem, size = 0x9000, scoped, tag = 'internal scratch']
  #allocation2 [shape = 'f32[4,1]{1,0:T(4,128)}', space=vmem, size = 0x800, scoped, tag = 'scratch operand']
  #allocation3 [shape = 'f32[4,1]{1,0:T(4,128)}', space=vmem, size = 0x800, scoped, tag = 'scratch operand']
  #allocation4 [shape = 'f32[4,1]{1,0:T(4,128)}', space=vmem, size = 0x800, scoped, tag = 'scratch operand']
  %s0 = inlined_call_operand.hbm [shape: f32[2,4,256], index: 0, kind: input, shape index: {}]
  %s1 = inlined_call_operand.vmem [shape: s8[2,1,256], index: 1, kind: input, shape index: {}]
  %s2 = inlined_call_operand.hbm [shape: f32[1,2,4,128], index: 2, kind: output, shape index: {0}]
  %s3 = inlined_call_operand.hbm [shape: f32[1,2,4,128], index: 3, kind: output, shape index: {1}]
  %s4 = inlined_call_operand.hbm [shape: f32[1,2,4,128], index: 4, kind: output, shape index: {2}]
  %5 = xla_tuple %s2, %s3, %s4
  %s6 = sld [smem:[#allocation0]]
  $region69: #{tpu_custom_call.1} parent=0
    _
  %s8 = ssub.s32 1, %s6
  %s9 = scalar_select 0, %s8, %s6
  $region1: #{tpu_custom_call.1} parent=0
    #allocation5 [shape = 'u8[8192]{0}', space=vmem, size = 0x2000, scoped, tag = 'input window, operand 0']
    #allocation6 [shape = 's32[2]{0}', space=sflag, size = 0x8, scoped, tag = 'scoped memory for tpu_custom_call.1']
    #allocation7 [shape = 's32[2]{0}', space=sflag, size = 0x8, scoped, tag = 'scoped memory for tpu_custom_call.1']
    #allocation8 [shape = 'u8[4096]{0}', space=vmem, size = 0x1000, scoped, tag = 'output window, operand 0']
    #allocation9 [shape = 'u8[4096]{0}', space=vmem, size = 0x1000, scoped, tag = 'output window, operand 1']
    #allocation10 [shape = 's32[2]{0}', space=sflag, size = 0x8, scoped, tag = 'scoped memory for tpu_custom_call.1']
    #allocation11 [shape = 'u8[4096]{0}', space=vmem, size = 0x1000, scoped, tag = 'output window, operand 2']
    %10 = vsyncpa [#allocation6], 0
    %s11 = scalar_lea.sflag [#allocation6], 1
    %12 = vsyncpa %s11, 0
    %13 = vsyncpa [#allocation7], 0
    %s14 = scalar_lea.sflag [#allocation7], 1
    %15 = vsyncpa %s14, 0
    %16 = vsyncpa [#allocation10], 0
    %s17 = scalar_lea.sflag [#allocation10], 1
    %18 = vsyncpa %s17, 0
    loop: start=0, step=1, limit=4
    $region2: #{tpu_custom_call.1} parent=1 // loop_pre_header
      _
    $region3: #{tpu_custom_call.1} parent=1 // loop_header
      %s20 = sphi 0, %s24
      %p21 = scmp.ge.s32.totalorder %s20, 4
      %s27 = sphi 0, %s46
      %s28 = sphi 0, %s42
      %s29 = sphi 0, %s38
      %s30 = sphi 0, %s27
      %s31 = sphi 0, %s28
      %s32 = sphi 0, %s29
      %s33 = sphi 0, %s30
      %s34 = sphi 0, %s31
      %s35 = sphi 0, %s32
      %s57 = sphi 0, %s59
      %s60 = sphi 0, %s57
      %s61 = sphi 0, %s60
      %s77 = sphi 0, %s61
      %s91 = sphi 0, %s93
      %s94 = sphi 0, %s91
      %s95 = sphi 0, %s94
      %s111 = sphi 0, %s95
      %s119 = sphi 0, %s121
      %s122 = sphi 0, %s119
      %s123 = sphi 0, %s122
      %s139 = sphi 0, %s123
      %s147 = sphi 0, %s149
      %s150 = sphi 0, %s147
      %s151 = sphi 0, %s150
      %s167 = sphi 0, %s151
      %s175 = sphi 0, %s177
      %s178 = sphi 0, %s175
      %s179 = sphi 0, %s178
      %s195 = sphi 0, %s179
    $region4: #{tpu_custom_call.1} parent=1 // loop_header_branch
      %23 = sbr.rel (%p21) target = $region8
    $region5: #{tpu_custom_call.1} parent=1 // loop_body
      %s25 = ssub.s32 %s20, 1
      %s26 = ssub.s32 %s20, 2
      %s36 = sadd.s32 1, %s29
      %p37 = scmp.ge.s32.totalorder %s36, 1
      %s38 = scalar_select %p37, 0, %s36
      %s39 = sadd.s32 1, %s28
      %s40 = scalar_select %p37, %s39, %s28
      %p41 = scmp.ge.s32.totalorder %s40, 2
      %s42 = scalar_select %p41, 0, %s40
      %s43 = sadd.s32 1, %s27
      %s44 = scalar_select %p41, %s43, %s27
      %p45 = scmp.ge.s32.totalorder %s44, 1
      %s46 = scalar_select %p45, 0, %s44
      %s47 = sadd.s32 %s27, %s29
      %p48 = scmp.lt.s32.totalorder %s47, 0
      %s49 = scalar_select %p48, %s47, 0
      %s50 = sadd.s32 %s46, %s38
      %p51 = scmp.lt.s32.totalorder %s50, 0
      %s52 = scalar_select %p51, %s50, 0
      %s53 = ssub.s32 %s28, %s42
      %s54 = ssub.s32 %s49, %s52
      %s55 = sor.u32 %s53, %s54
      %p56 = scmp.eq.s32.totalorder %s55, 0
      %s58 = sadd.s32 %s57, 1
      %s59 = scalar_select %p56, %s57, %s58
      %p62 = pneg %p56
      %p63 = scmp.eq.s32.totalorder %s20, 1
      %p64 = por %p62, %p63
      %p65 = scmp.ne.s32.totalorder %s57, %s60
      %p66 = scmp.eq.s32.totalorder %s20, 0
      %p67 = por %p65, %p66
      %p68 = scmp.ne.s32.totalorder %s57, %s60
      %p69 = scmp.eq.s32.totalorder %s25, 1
      %p70 = por %p68, %p69
      %p71 = scmp.ne.s32.totalorder %s60, %s61
      %p72 = scmp.eq.s32.totalorder %s25, 0
      %p73 = por %p71, %p72
      %p74 = scmp.ne.s32.totalorder %s60, %s61
      %p75 = scmp.eq.s32.totalorder %s26, 1
      %p76 = por %p74, %p75
      %p78 = scmp.ne.s32.totalorder %s61, %s77
      %p79 = scmp.eq.s32.totalorder %s26, 0
      %p80 = por %p78, %p79
      %s81 = sadd.s32 %s27, %s29
      %p82 = scmp.lt.s32.totalorder %s81, 0
      %s83 = scalar_select %p82, %s81, 0
      %s84 = sadd.s32 %s46, %s38
      %p85 = scmp.lt.s32.totalorder %s84, 0
      %s86 = scalar_select %p85, %s84, 0
      %s87 = ssub.s32 %s28, %s42
      %s88 = ssub.s32 %s83, %s86
      %s89 = sor.u32 %s87, %s88
      %p90 = scmp.eq.s32.totalorder %s89, 0
      %s92 = sadd.s32 %s91, 1
      %s93 = scalar_select %p90, %s91, %s92
      %p96 = pneg %p90
      %p97 = scmp.eq.s32.totalorder %s20, 1
      %p98 = por %p96, %p97
      %p99 = scmp.ne.s32.totalorder %s91, %s94
      %p100 = scmp.eq.s32.totalorder %s20, 0
      %p101 = por %p99, %p100
      %p102 = scmp.ne.s32.totalorder %s91, %s94
      %p103 = scmp.eq.s32.totalorder %s25, 1
      %p104 = por %p102, %p103
      %p105 = scmp.ne.s32.totalorder %s94, %s95
      %p106 = scmp.eq.s32.totalorder %s25, 0
      %p107 = por %p105, %p106
      %p108 = scmp.ne.s32.totalorder %s94, %s95
      %p109 = scmp.eq.s32.totalorder %s26, 1
      %p110 = por %p108, %p109
      %p112 = scmp.ne.s32.totalorder %s95, %s111
      %p113 = scmp.eq.s32.totalorder %s26, 0
      %p114 = por %p112, %p113
      %s115 = ssub.s32 %s27, %s46
      %s116 = ssub.s32 %s28, %s42
      %s117 = sor.u32 %s115, %s116
      %p118 = scmp.eq.s32.totalorder %s117, 0
      %s120 = sadd.s32 %s119, 1
      %s121 = scalar_select %p118, %s119, %s120
      %p124 = pneg %p118
      %p125 = scmp.eq.s32.totalorder %s20, 1
      %p126 = por %p124, %p125
      %p127 = scmp.ne.s32.totalorder %s119, %s122
      %p128 = scmp.eq.s32.totalorder %s20, 0
      %p129 = por %p127, %p128
      %p130 = scmp.ne.s32.totalorder %s119, %s122
      %p131 = scmp.eq.s32.totalorder %s25, 1
      %p132 = por %p130, %p131
      %p133 = scmp.ne.s32.totalorder %s122, %s123
      %p134 = scmp.eq.s32.totalorder %s25, 0
      %p135 = por %p133, %p134
      %p136 = scmp.ne.s32.totalorder %s122, %s123
      %p137 = scmp.eq.s32.totalorder %s26, 1
      %p138 = por %p136, %p137
      %p140 = scmp.ne.s32.totalorder %s123, %s139
      %p141 = scmp.eq.s32.totalorder %s26, 0
      %p142 = por %p140, %p141
      %s143 = ssub.s32 %s27, %s46
      %s144 = ssub.s32 %s28, %s42
      %s145 = sor.u32 %s143, %s144
      %p146 = scmp.eq.s32.totalorder %s145, 0
      %s148 = sadd.s32 %s147, 1
      %s149 = scalar_select %p146, %s147, %s148
      %p152 = pneg %p146
      %p153 = scmp.eq.s32.totalorder %s20, 1
      %p154 = por %p152, %p153
      %p155 = scmp.ne.s32.totalorder %s147, %s150
      %p156 = scmp.eq.s32.totalorder %s20, 0
      %p157 = por %p155, %p156
      %p158 = scmp.ne.s32.totalorder %s147, %s150
      %p159 = scmp.eq.s32.totalorder %s25, 1
      %p160 = por %p158, %p159
      %p161 = scmp.ne.s32.totalorder %s150, %s151
      %p162 = scmp.eq.s32.totalorder %s25, 0
      %p163 = por %p161, %p162
      %p164 = scmp.ne.s32.totalorder %s150, %s151
      %p165 = scmp.eq.s32.totalorder %s26, 1
      %p166 = por %p164, %p165
      %p168 = scmp.ne.s32.totalorder %s151, %s167
      %p169 = scmp.eq.s32.totalorder %s26, 0
      %p170 = por %p168, %p169
      %s171 = ssub.s32 %s27, %s46
      %s172 = ssub.s32 %s28, %s42
      %s173 = sor.u32 %s171, %s172
      %p174 = scmp.eq.s32.totalorder %s173, 0
      %s176 = sadd.s32 %s175, 1
      %s177 = scalar_select %p174, %s175, %s176
      %p180 = pneg %p174
      %p181 = scmp.eq.s32.totalorder %s20, 1
      %p182 = por %p180, %p181
      %p183 = scmp.ne.s32.totalorder %s175, %s178
      %p184 = scmp.eq.s32.totalorder %s20, 0
      %p185 = por %p183, %p184
      %p186 = scmp.ne.s32.totalorder %s175, %s178
      %p187 = scmp.eq.s32.totalorder %s25, 1
      %p188 = por %p186, %p187
      %p189 = scmp.ne.s32.totalorder %s178, %s179
      %p190 = scmp.eq.s32.totalorder %s25, 0
      %p191 = por %p189, %p190
      %p192 = scmp.ne.s32.totalorder %s178, %s179
      %p193 = scmp.eq.s32.totalorder %s26, 1
      %p194 = por %p192, %p193
      %p196 = scmp.ne.s32.totalorder %s179, %s195
      %p197 = scmp.eq.s32.totalorder %s26, 0
      %p198 = por %p196, %p197
      %p199 = scmp.le.s32.totalorder 1, %s20
      %p200 = scmp.lt.s32.totalorder %s20, 3
      %p201 = pnand %p199, %p200
      %p202 = pneg %p201
      // Predicated region
      $region9: #{tpu_custom_call.1} parent=5 // pred_check
        _
      $region10: #{tpu_custom_call.1} parent=5 // pred_check_branch
        %204 = sbr.rel (%p201) target = $region12
      $region11: #{tpu_custom_call.1} parent=5 // pred_region
        %s205 = ssub.s32 %s20, 1
      $region12: #{tpu_custom_call.1} parent=5 // pred_fallthru
        _
      %p206 = scmp.lt.s32.totalorder %s20, 2
      // Predicated region
      $region13: #{tpu_custom_call.1} parent=5 // pred_check
        %p207 = pneg %p206
      $region14: #{tpu_custom_call.1} parent=5 // pred_check_branch
        %209 = sbr.rel (%p207) target = $region16
      $region15: #{tpu_custom_call.1} parent=5 // pred_region
        // Predicated region
        $region17: #{tpu_custom_call.1} parent=15 // pred_check
          %p210 = pneg %p67
        $region18: #{tpu_custom_call.1} parent=15 // pred_check_branch
          %212 = sbr.rel (%p210) target = $region20
        $region19: #{tpu_custom_call.1} parent=15 // pred_region
          %s213 = sand.u32 %s57, 1
          %s214 = scalar_lea.sflag [#allocation6], %s213
          %s215 = sand.u32 %s57, 1
          %s216 = smul.addr %s215, 8
          %s217 = scalar_lea.vmem [#allocation5], %s216
          %s218 = sadd.s32 %s27, %s29
          %p219 = scmp.lt.s32.totalorder %s218, 0
          %s220 = scalar_select %p219, %s218, 0
          %s221 = smul.u32 2, %s220
          %223 = vsyncadd %s214, 0
          %s224 = smul.addr %s28, 2
          %s225 = sadd.s32 %s221, %s224
          %s226 = smul.addr %s225, 4
          %s227 = scalar_lea.hbm %s0, %s226
          %s229 = sshll.u32 %s227, 4
          %s230 = int_to_ptr.hbm [resolvable:$true] %s229
          %s231 = sshll.u32 %s217, 4
          %s232 = int_to_ptr.vmem [resolvable:$true] %s231
          %234 = dma.hbm_to_vmem [thread:$0]  %s230, 128, %s232, %s214
        $region20: #{tpu_custom_call.1} parent=15 // pred_fallthru
          _
        // Predicated region
        $region21: #{tpu_custom_call.1} parent=15 // pred_check
          %p235 = pneg %p101
        $region22: #{tpu_custom_call.1} parent=15 // pred_check_branch
          %237 = sbr.rel (%p235) target = $region24
        $region23: #{tpu_custom_call.1} parent=15 // pred_region
          %s238 = sadd.s32 %s27, %s29
          %p239 = scmp.lt.s32.totalorder %s238, 0
          %s240 = scalar_select %p239, %s238, 0
          %s241 = smul.u32 2, %s240
          %p242 = scmp.lt.s32.totalorder %s28, 1
          %s243 = scalar_select %p242, %s28, 1
          %p244 = scmp.lt.s32.totalorder %s241, 1
          %s245 = scalar_select %p244, %s241, 1
          %s246 = smul.addr %s243, 2
          %s247 = sadd.s32 %s245, %s246
          %s248 = scalar_lea.vmem %s1, %s247
          %s249 = sadd.s32 %s27, %s29
          %p250 = scmp.lt.s32.totalorder %s249, 0
          %s251 = scalar_select %p250, %s249, 0
          %s252 = smul.u32 2, %s251
        $region24: #{tpu_custom_call.1} parent=15 // pred_fallthru
          _
      $region16: #{tpu_custom_call.1} parent=5 // pred_fallthru
        _
      %p253 = scmp.le.s32.totalorder 1, %s20
      %p254 = scmp.lt.s32.totalorder %s20, 3
      %p255 = pnand %p253, %p254
      %p256 = pneg %p255
      // Predicated region
      $region25: #{tpu_custom_call.1} parent=5 // pred_check
        _
      $region26: #{tpu_custom_call.1} parent=5 // pred_check_branch
        %258 = sbr.rel (%p255) target = $region28
      $region27: #{tpu_custom_call.1} parent=5 // pred_region
        %s259 = ssub.s32 %s20, 1
        %s260 = sand.u32 %s60, 1
        %s261 = scalar_lea.sflag [#allocation6], %s260
        %s262 = sand.u32 %s60, 1
        %s263 = smul.addr %s262, 8
        %s264 = scalar_lea.vmem [#allocation5], %s263
        // Predicated region
        $region29: #{tpu_custom_call.1} parent=27 // pred_check
          %p265 = pneg %p73
        $region30: #{tpu_custom_call.1} parent=27 // pred_check_branch
          %267 = sbr.rel (%p265) target = $region32
        $region31: #{tpu_custom_call.1} parent=27 // pred_region
          %269 = dma.done %s261, 128
        $region32: #{tpu_custom_call.1} parent=27 // pred_fallthru
          _
        %s270 = sand.u32 %s60, 1
        %s271 = scalar_lea.sflag [#allocation6], %s270
        %s272 = sand.u32 %s60, 1
        %s273 = smul.addr %s272, 8
        %s274 = scalar_lea.vmem [#allocation5], %s273
        %p275 = pneg %p73
        %p276 = pneg %p70
        %s277 = sadd.s32 %s30, %s32
        %p278 = scmp.lt.s32.totalorder %s277, 0
        %s279 = scalar_select %p278, %s277, 0
        %s280 = smul.u32 2, %s279
        %p281 = scmp.lt.s32.totalorder %s31, 1
        %s282 = scalar_select %p281, %s31, 1
        %p283 = scmp.lt.s32.totalorder %s280, 1
        %s284 = scalar_select %p283, %s280, 1
        %s285 = smul.addr %s282, 2
        %s286 = sadd.s32 %s284, %s285
        %s287 = scalar_lea.vmem %s1, %s286
        %p288 = pneg %p107
        %p289 = pneg %p104
        %p290 = pneg %p135
        %p291 = pneg %p132
        %s292 = sand.u32 %s122, 1
        %s293 = scalar_lea.sflag [#allocation7], %s292
        %s294 = sand.u32 %s122, 1
        %s295 = smul.addr %s294, 4
        %s296 = scalar_lea.vmem [#allocation8], %s295
        %p297 = pneg %p163
        %p298 = pneg %p160
        %s299 = sand.u32 %s25, 1
        %s300 = scalar_lea.sflag [#allocation10], %s299
        %s301 = sand.u32 %s150, 1
        %s302 = smul.addr %s301, 4
        %s303 = scalar_lea.vmem [#allocation9], %s302
        %p304 = pneg %p191
        %p305 = pneg %p188
        %s306 = sand.u32 %s25, 1
        %s307 = scalar_lea.sflag [#allocation10], %s306
        %s308 = sand.u32 %s178, 1
        %s309 = smul.addr %s308, 4
        %s310 = scalar_lea.vmem [#allocation11], %s309
        %s311 = sadd.s32 %s30, %s32
        %p312 = scmp.lt.s32.totalorder %s311, 0
        %s313 = scalar_select %p312, %s311, 0
        %s314 = smul.u32 2, %s313
        %s315 = sadd.s32 %s30, %s32
        %p316 = scmp.lt.s32.totalorder %s315, 0
        %s317 = scalar_select %p316, %s315, 0
        %s318 = smul.u32 2, %s317
        %p319 = scmp.lt.s32.totalorder %s31, 1
        %s320 = scalar_select %p319, %s31, 1
        %p321 = scmp.lt.s32.totalorder %s318, 1
        %s322 = scalar_select %p321, %s318, 1
        %s323 = smul.addr %s320, 2
        %s324 = sadd.s32 %s322, %s323
        %s325 = scalar_lea.vmem %s1, %s324
        %s326 = sadd.s32 %s30, %s32
        %p327 = scmp.lt.s32.totalorder %s326, 0
        %s328 = scalar_select %p327, %s326, 0
        %s329 = smul.u32 2, %s328
        %p330 = scmp.eq.s32.totalorder %s32, 0
        // Predicated region
        $region33: #{tpu_custom_call.1} parent=27 // pred_check
          %p331 = pneg %p330
        $region34: #{tpu_custom_call.1} parent=27 // pred_check_branch
          %333 = sbr.rel (%p331) target = $region36
        $region35: #{tpu_custom_call.1} parent=27 // pred_region
          %vm334 = vcmask 3072
          %335 = vst.msk [vmem:[#allocation2] sm:$0xf] %vm334, 0.0
          %336 = vst.msk [vmem:[#allocation3] sm:$0xf] %vm334, 0.0
          %337 = vst.msk [vmem:[#allocation4] sm:$0xf] %vm334, 0.0
        $region36: #{tpu_custom_call.1} parent=27 // pred_fallthru
          _
        %v338 = vld [vmem:[%s264] sm:$0xff]
        %340 = vst [vmem:[#allocation1] ss:$2 sm:$0xff] %v338
        %v341 = vld.sshfl [vmem:[#allocation1] sm:$0xff pattern:$0x75316420]
        %v342 = vld.sshfl [vmem:[#allocation1 + $0x8] sm:$0xff pattern:$0x75316420]
        %vm345 = vcmask 1043456
        %v346 = vsel %vm345, %v341, -inf
        %v347 = vrot.slane %v346, 4
        %v348 = vmax.f32 %v346, %v347
        %v349 = vrot.slane %v348, 2
        %v350 = vmax.f32 %v348, %v349
        %v351 = vrot.slane %v350, 1
        %v352 = vmax.f32 %v350, %v351
        %v353 = vsel %vm345, %v342, -inf
        %v354 = vrot.slane %v353, 4
        %v355 = vmax.f32 %v353, %v354
        %v356 = vrot.slane %v355, 2
        %v357 = vmax.f32 %v355, %v356
        %v358 = vrot.slane %v357, 1
        %v359 = vmax.f32 %v357, %v358
        %v362 = vrot.slane %v359, 4
        %v363 = vsel %vm345, %v352, %v362
        %v365 = vsub.f32 %v338, %v363
        %v366 = vmul.f32 %v365, 1.442695
        %v367 = vpow.pop %v366
        %369 = vst [vmem:[#allocation1] ss:$2 sm:$0xff] %v367
        %v370 = vld.sshfl [vmem:[#allocation1] sm:$0xff pattern:$0x75316420]
        %v371 = vld.sshfl [vmem:[#allocation1 + $0x8] sm:$0xff pattern:$0x75316420]
        %v374 = vsel %vm345, %v370, 0.0
        %v375 = vrot.slane %v374, 4
        %v376 = vadd.f32 %v374, %v375
        %v377 = vrot.slane %v376, 2
        %v378 = vadd.f32 %v376, %v377
        %v379 = vrot.slane %v378, 1
        %v380 = vadd.f32 %v378, %v379
        %v381 = vsel %vm345, %v371, 0.0
        %v382 = vrot.slane %v381, 4
        %v383 = vadd.f32 %v381, %v382
        %v384 = vrot.slane %v383, 2
        %v385 = vadd.f32 %v383, %v384
        %v386 = vrot.slane %v385, 1
        %v387 = vadd.f32 %v385, %v386
        %v388 = vrcp.pop %v380
        %v389 = vmul.f32 %v380, %v388
        %v390 = vsub.f32 1.0, %v389
        %v391 = vmul.f32 %v388, %v390
        %v392 = vadd.f32 %v388, %v391
        %vm393 = vweird.f32 %v380
        %vm394 = vweird.f32 %v388
        %vm395 = vmor %vm393, %vm394
        %v396 = vsel %vm395, %v388, %v392
        %v397 = vand.u32 2147483647, %v380
        %vm398 = vcmp.eq.f32.partialorder %v397, 8.507059e+37
        %v399 = vand.u32 %v380, 2147483648
        %v400 = vor.u32 1.1754944e-38, %v399
        %v401 = vsel %vm398, %v400, %v396
        %v402 = vrcp.pop %v387
        %v403 = vmul.f32 %v387, %v402
        %v404 = vsub.f32 1.0, %v403
        %v405 = vmul.f32 %v402, %v404
        %v406 = vadd.f32 %v402, %v405
        %vm407 = vweird.f32 %v387
        %vm408 = vweird.f32 %v402
        %vm409 = vmor %vm407, %vm408
        %v410 = vsel %vm409, %v402, %v406
        %v411 = vand.u32 2147483647, %v387
        %vm412 = vcmp.eq.f32.partialorder %v411, 8.507059e+37
        %v413 = vand.u32 %v387, 2147483648
        %v414 = vor.u32 1.1754944e-38, %v413
        %v415 = vsel %vm412, %v414, %v410
        %v418 = vrot.slane %v415, 4
        %v419 = vsel %vm345, %v401, %v418
        %v421 = vmul.f32 %v367, %v419
        %v422 = vld [vmem:[%s325] sm:$0x3]
        %v423 = vunpack.c.0.s8 %v422
        %v424 = vlaneseq
        %v425 = vshrl.u32 %v424, 7
        %v426 = vperm.slane %v423, 0
        %v427 = vperm.slane %v423, 4
        %v428 = vperm.slane %v426, 0
        %v429 = vperm.slane %v427, 0
        %vm430 = vcmp.eq.s32.totalorder %v428, %v425
        %vm431 = vcmp.eq.s32.totalorder %v429, %v425
        %v432 = vsel %vm430, 1, 0
        %v433 = vsel %vm431, 1, 0
        %v434 = vcvt.s32.f32 %v432
        %v435 = vcvt.s32.f32 %v433
        %v436 = vld [vmem:[#allocation2] sm:$0xf]
        %v439 = vrot.slane %v435, 4
        %v440 = vsel %vm345, %v434, %v439
        %v442 = vmul.f32 %v421, %v440
        %444 = vst [vmem:[#allocation1] ss:$2 sm:$0xff] %v442
        %v445 = vld.sshfl [vmem:[#allocation1] sm:$0xff pattern:$0x75316420]
        %v446 = vld.sshfl [vmem:[#allocation1 + $0x8] sm:$0xff pattern:$0x75316420]
        %v449 = vsel %vm345, %v445, 0.0
        %v450 = vsel %vm345, %v446, 0.0
        %v451 = vadd.f32 %v449, %v450
        %452 = vadd.xlane.f32.xlu0 %v451
        %v453 = vpop.xlane.xlu0 %452
        %v454 = vadd.f32 %v436, %v453
        %vm455 = vcmask 3072
        %456 = vst.msk [vmem:[#allocation2] sm:$0xf] %vm455, %v454
        %v457 = vld [vmem:[#allocation3] sm:$0xf]
        %459 = vst [vmem:[#allocation1] ss:$2 sm:$0xff] %v421
        %v460 = vld.sshfl [vmem:[#allocation1] sm:$0xff pattern:$0x75316420]
        %v461 = vld.sshfl [vmem:[#allocation1 + $0x8] sm:$0xff pattern:$0x75316420]
        %v464 = vsel %vm345, %v460, 0.0
        %v465 = vsel %vm345, %v461, 0.0
        %v466 = vadd.f32 %v464, %v465
        %467 = vadd.xlane.f32.xlu0 %v466
        %v468 = vpop.xlane.xlu0 %467
        %v469 = vadd.f32 %v457, %v468
        %470 = vst.msk [vmem:[#allocation3] sm:$0xf] %vm455, %v469
        %v471 = vld [vmem:[#allocation4] sm:$0xf]
        %v472 = vsel %vm345, %v434, 0.0
        %v473 = vsel %vm345, %v435, 0.0
        %v474 = vadd.f32 %v472, %v473
        %475 = vadd.xlane.f32.xlu0 %v474
        %v476 = vpop.xlane.xlu0 %475
        %v477 = vadd.f32 %v471, %v476
        %478 = vst.msk [vmem:[#allocation4] sm:$0xf] %vm455, %v477
        // Predicated region
        $region37: #{tpu_custom_call.1} parent=27 // pred_check
          %p479 = pneg %p330
        $region38: #{tpu_custom_call.1} parent=27 // pred_check_branch
          %481 = sbr.rel (%p479) target = $region40
        $region39: #{tpu_custom_call.1} parent=27 // pred_region
          %v482 = vld [vmem:[#allocation2] sm:$0xf]
          %484 = vset.pattern.permute.xlu0 0
          %485 = vperm.xlu0 %484, %v482
          %v486 = vpop.permute.xlu0 %485
          %488 = vst [vmem:[%s296] sm:$0xf] %v486
          %v489 = vld [vmem:[#allocation3] sm:$0xf]
          %491 = vset.pattern.permute.xlu0 0
          %492 = vperm.xlu0 %491, %v489
          %v493 = vpop.permute.xlu0 %492
          %495 = vst [vmem:[%s303] sm:$0xf] %v493
          %v496 = vld [vmem:[#allocation4] sm:$0xf]
          %498 = vset.pattern.permute.xlu0 0
          %499 = vperm.xlu0 %498, %v496
          %v500 = vpop.permute.xlu0 %499
          %502 = vst [vmem:[%s310] sm:$0xf] %v500
        $region40: #{tpu_custom_call.1} parent=27 // pred_fallthru
          _
        %s503 = sand.u32 %s122, 1
        %s504 = scalar_lea.sflag [#allocation7], %s503
        %s505 = sand.u32 %s122, 1
        %s506 = smul.addr %s505, 4
        %s507 = scalar_lea.vmem [#allocation8], %s506
        %s508 = sand.u32 %s25, 1
        %s509 = scalar_lea.sflag [#allocation10], %s508
        %s510 = sand.u32 %s150, 1
        %s511 = smul.addr %s510, 4
        %s512 = scalar_lea.vmem [#allocation9], %s511
        %s513 = sand.u32 %s25, 1
        %s514 = scalar_lea.sflag [#allocation10], %s513
        %s515 = sand.u32 %s178, 1
        %s516 = smul.addr %s515, 4
        %s517 = scalar_lea.vmem [#allocation11], %s516
        // Predicated region
        $region41: #{tpu_custom_call.1} parent=27 // pred_check
          %p518 = pneg %p132
        $region42: #{tpu_custom_call.1} parent=27 // pred_check_branch
          %520 = sbr.rel (%p518) target = $region44
        $region43: #{tpu_custom_call.1} parent=27 // pred_region
          %522 = vsyncadd %s504, 0
          %s523 = smul.addr %s30, 2
          %s524 = sadd.s32 %s31, %s523
          %s525 = smul.addr %s524, 4
          %s526 = scalar_lea.hbm %s2, %s525
          %s528 = sshll.u32 %s507, 4
          %s529 = int_to_ptr.vmem [resolvable:$true] %s528
          %s530 = sshll.u32 %s526, 4
          %s531 = int_to_ptr.hbm [resolvable:$true] %s530
          %533 = dma.vmem_to_hbm [thread:$0]  %s529, 64, %s531, %s504
        $region44: #{tpu_custom_call.1} parent=27 // pred_fallthru
          _
        // Predicated region
        $region45: #{tpu_custom_call.1} parent=27 // pred_check
          %p534 = pneg %p160
        $region46: #{tpu_custom_call.1} parent=27 // pred_check_branch
          %536 = sbr.rel (%p534) target = $region48
        $region47: #{tpu_custom_call.1} parent=27 // pred_region
          %538 = vsyncadd %s509, 0
          %s539 = smul.addr %s30, 2
          %s540 = sadd.s32 %s31, %s539
          %s541 = smul.addr %s540, 4
          %s542 = scalar_lea.hbm %s3, %s541
          %s544 = sshll.u32 %s512, 4
          %s545 = int_to_ptr.vmem [resolvable:$true] %s544
          %s546 = sshll.u32 %s542, 4
          %s547 = int_to_ptr.hbm [resolvable:$true] %s546
          %549 = dma.vmem_to_hbm [thread:$0]  %s545, 64, %s547, %s509
        $region48: #{tpu_custom_call.1} parent=27 // pred_fallthru
          _
        // Predicated region
        $region49: #{tpu_custom_call.1} parent=27 // pred_check
          %p550 = pneg %p188
        $region50: #{tpu_custom_call.1} parent=27 // pred_check_branch
          %552 = sbr.rel (%p550) target = $region52
        $region51: #{tpu_custom_call.1} parent=27 // pred_region
          %554 = vsyncadd %s514, 0
          %s555 = smul.addr %s30, 2
          %s556 = sadd.s32 %s31, %s555
          %s557 = smul.addr %s556, 4
          %s558 = scalar_lea.hbm %s4, %s557
          %s560 = sshll.u32 %s517, 4
          %s561 = int_to_ptr.vmem [resolvable:$true] %s560
          %s562 = sshll.u32 %s558, 4
          %s563 = int_to_ptr.hbm [resolvable:$true] %s562
          %565 = dma.vmem_to_hbm [thread:$0]  %s561, 64, %s563, %s514
        $region52: #{tpu_custom_call.1} parent=27 // pred_fallthru
          _
      $region28: #{tpu_custom_call.1} parent=5 // pred_fallthru
        _
      %p566 = scmp.le.s32.totalorder 2, %s20
      // Predicated region
      $region53: #{tpu_custom_call.1} parent=5 // pred_check
        %p567 = pneg %p566
      $region54: #{tpu_custom_call.1} parent=5 // pred_check_branch
        %569 = sbr.rel (%p567) target = $region56
      $region55: #{tpu_custom_call.1} parent=5 // pred_region
        %s570 = ssub.s32 %s20, 2
        // Predicated region
        $region57: #{tpu_custom_call.1} parent=55 // pred_check
          %p571 = pneg %p138
        $region58: #{tpu_custom_call.1} parent=55 // pred_check_branch
          %573 = sbr.rel (%p571) target = $region60
        $region59: #{tpu_custom_call.1} parent=55 // pred_region
          %s574 = sand.u32 %s123, 1
          %s575 = scalar_lea.sflag [#allocation7], %s574
          %s576 = sand.u32 %s123, 1
          %s577 = smul.addr %s576, 4
          %s578 = scalar_lea.vmem [#allocation8], %s577
          %580 = dma.done %s575, 64
        $region60: #{tpu_custom_call.1} parent=55 // pred_fallthru
          _
        // Predicated region
        $region61: #{tpu_custom_call.1} parent=55 // pred_check
          %p581 = pneg %p166
        $region62: #{tpu_custom_call.1} parent=55 // pred_check_branch
          %583 = sbr.rel (%p581) target = $region64
        $region63: #{tpu_custom_call.1} parent=55 // pred_region
          %s584 = sand.u32 %s26, 1
          %s585 = scalar_lea.sflag [#allocation10], %s584
          %s586 = sand.u32 %s151, 1
          %s587 = smul.addr %s586, 4
          %s588 = scalar_lea.vmem [#allocation9], %s587
          %590 = dma.done %s585, 64
        $region64: #{tpu_custom_call.1} parent=55 // pred_fallthru
          _
        // Predicated region
        $region65: #{tpu_custom_call.1} parent=55 // pred_check
          %p591 = pneg %p194
        $region66: #{tpu_custom_call.1} parent=55 // pred_check_branch
          %593 = sbr.rel (%p591) target = $region68
        $region67: #{tpu_custom_call.1} parent=55 // pred_region
          %s594 = sand.u32 %s26, 1
          %s595 = scalar_lea.sflag [#allocation10], %s594
          %s596 = sand.u32 %s179, 1
          %s597 = smul.addr %s596, 4
          %s598 = scalar_lea.vmem [#allocation11], %s597
          %600 = dma.done %s595, 64
        $region68: #{tpu_custom_call.1} parent=55 // pred_fallthru
          _
      $region56: #{tpu_custom_call.1} parent=5 // pred_fallthru
        _
    $region6: #{tpu_custom_call.1} parent=1 // loop_footer
      %s24 = sadd.s32 1, %s20
    $region7: #{tpu_custom_call.1} parent=1 // loop_footer_branch
      %19 = sbr.rel target = $region3
    $region8: #{tpu_custom_call.1} parent=1 // loop_exit
      _
    %601 = vsyncpa [#allocation6], 1
    %s602 = scalar_lea.sflag [#allocation6], 1
    %603 = vsyncpa %s602, 1
    %604 = vsyncpa [#allocation7], 1
    %s605 = scalar_lea.sflag [#allocation7], 1
    %606 = vsyncpa %s605, 1
    %607 = vsyncpa [#allocation10], 1
    %s608 = scalar_lea.sflag [#allocation10], 1
    %609 = vsyncpa %s608, 1

</llo_original>
